<compile_context>
chip_gen: v6e
topology: v6e:2x2x1
jax: 0.10.0
libtpu: 0.0.40
codegen_flags: <defaults>
</compile_context>

<pallas_src>
import jax
import jax.numpy as jnp
from jax import lax
from jax.experimental import pallas as pl
from jax.experimental.pallas import tpu as pltpu

NUM_CLASSES = 10
IN_FEATURES = 32 * 32 * 3  # 3072

# Batch tile used once B exceeds a single block:
#  * multiple of 8 (sublane granularity) and >=256 so v6e/v7x 2x256^2 MXU
#    passes run with full row occupancy once the kernel is compute-bound
#    (>=128 suffices on v5e's 4x128^2 MXU),
#  * small enough (3 MiB double-buffered bf16) for v5e's 16 MiB scoped VMEM
#    and v7x's 64 MiB physical / 32 MiB scoped VMEM alike.
BATCH_TILE = 256


def _linear_kernel(x_ref, w_ref, b_ref, o_ref):
    """o = x @ W^T + b for one batch tile (all operands resident in VMEM).

    x_ref: (tb, K) bf16   w_ref: (N, K) bf16   b_ref: (1, N) f32   o_ref: (tb, N) f32

    Contract over the last dim of both operands (trans_b form): the weight
    keeps its native lane-dense (N, K) layout, no in-kernel transpose, and
    accumulation happens in f32 on the MXU.
    """
    acc = lax.dot_general(
        x_ref[...],
        w_ref[...],
        dimension_numbers=(((1,), (1,)), ((), ())),
        preferred_element_type=jnp.float32,
    )
    o_ref[...] = (acc + b_ref[...]).astype(o_ref.dtype)


def linear_forward(x, weight, bias, *, batch_tile=BATCH_TILE):
    """Forward of the PyTorch `Linear` module: x.view(B, -1) @ W.T + b.

    x: (B, 3, 32, 32) f32; weight: (N, K) f32; bias: (N,) f32 -> (B, N) f32.
    """
    B = x.shape[0]
    x2d = x.reshape(B, -1)                       # row-major == torch .view(B, -1)
    K = x2d.shape[1]
    N, Kw = weight.shape
    assert K == Kw, "flattened input features must match weight's in_features"

    # bf16 inputs, f32 bias / accumulate / output.
    xb = x2d.astype(jnp.bfloat16)
    wb = weight.astype(jnp.bfloat16)
    b2d = bias.reshape(1, N).astype(jnp.float32)

    # Single block for small B (block == full dim satisfies the (8,128) rule);
    # otherwise tile the batch.  batch_tile is a multiple of 8; a ragged last
    # block is handled by Pallas (writes past B are masked).
    tb = B if B <= batch_tile else batch_tile
    grid = (pl.cdiv(B, tb),)

    return pl.pallas_call(
        _linear_kernel,
        out_shape=jax.ShapeDtypeStruct((B, N), jnp.float32),
        grid=grid,
        in_specs=[
            pl.BlockSpec((tb, K), lambda i: (i, 0)),   # x tile, streamed
            pl.BlockSpec((N, K), lambda i: (0, 0)),    # W, resident, lane-dense
            pl.BlockSpec((1, N), lambda i: (0, 0)),    # bias, resident
        ],
        out_specs=pl.BlockSpec((tb, N), lambda i: (i, 0)),
        compiler_params=pltpu.CompilerParams(
            # Single no-op step at B=2; shards batch blocks across v7x's
            # 2 TensorCores when B grows (free on 1-TC v5e/v6e).
            dimension_semantics=("parallel",),
        ),
        cost_estimate=pl.CostEstimate(
            flops=2 * B * K * N,
            transcendentals=0,
            bytes_accessed=B * K * 2 + N * K * 2 + N * 4 + B * N * 4,
        ),
    )(xb, wb, b2d)


if __name__ == "__main__":
    key = jax.random.PRNGKey(0)
    kx, kw, kb = jax.random.split(key, 3)

    # Deterministic synthetic parameters (shapes from nn.Linear(3072, 10)).
    weight = jax.random.normal(kw, (NUM_CLASSES, IN_FEATURES), dtype=jnp.float32) * 0.02
    bias = jax.random.normal(kb, (NUM_CLASSES,), dtype=jnp.float32) * 0.02

    def references(x):
        x2d = x.reshape(x.shape[0], -1)
        # What the kernel actually computes: bf16-quantized operands, f32 acc.
        xq = x2d.astype(jnp.bfloat16).astype(jnp.float32)
        wq = weight.astype(jnp.bfloat16).astype(jnp.float32)
        ref_q = xq @ wq.T + bias
        # Full-precision reference (nn.Linear math).
        ref_f32 = x2d @ weight.T + bias
        return ref_q, ref_f32

    # 1) Small batch (single-block path), same shape the PyTorch module expects.
    x_small = jax.random.normal(kx, (2, 3, 32, 32), dtype=jnp.float32)
    out = jax.block_until_ready(linear_forward(x_small, weight, bias))
    ref_q, ref_f32 = references(x_small)
    assert out.shape == (2, NUM_CLASSES)
    assert jnp.allclose(out, ref_q, atol=1e-3, rtol=1e-3), "bf16-quantized mismatch"
    assert jnp.allclose(out, ref_f32, atol=5e-2, rtol=5e-2), "f32 reference mismatch"

    # 2) Larger batch exercising the tiled, "parallel" batch-grid path (2 blocks).
    x_big = jax.random.normal(kx, (512, 3, 32, 32), dtype=jnp.float32)
    out_big = jax.block_until_ready(linear_forward(x_big, weight, bias))
    ref_qb, ref_f32b = references(x_big)
    assert out_big.shape == (512, NUM_CLASSES)
    assert jnp.allclose(out_big, ref_qb, atol=1e-3, rtol=1e-3), "bf16-quantized mismatch (tiled)"
    assert jnp.allclose(out_big, ref_f32b, atol=5e-2, rtol=5e-2), "f32 reference mismatch (tiled)"

    print("KERNEL_OK")
</pallas_src>

<mosaic_0001>
module attributes {stable_mosaic.version = 11 : i64} {
  func.func @_linear_kernel(%arg0: i32, %arg1: memref<2x3072xbf16, #tpu.memory_space<vmem>>, %arg2: memref<10x3072xbf16, #tpu.memory_space<vmem>>, %arg3: memref<1x10xf32, #tpu.memory_space<vmem>>, %arg4: memref<2x10xf32, #tpu.memory_space<vmem>>) attributes {dimension_semantics = [#tpu.dimension_semantics<parallel>], iteration_bounds = array<i64: 1>, scalar_prefetch = 0 : i64, scratch_operands = 0 : i64, tpu.core_type = #tpu.core_type<tc>, window_params = [{transform_indices = @transform_0, window_bounds = array<i64: 2, 3072>}, {pipeline_mode = #tpu.pipeline_mode<synchronous>, transform_indices = @transform_1, window_bounds = array<i64: 10, 3072>}, {pipeline_mode = #tpu.pipeline_mode<synchronous>, transform_indices = @transform_2, window_bounds = array<i64: 1, 10>}, {transform_indices = @transform_3, window_bounds = array<i64: 2, 10>}]} {
    %c0 = arith.constant 0 : index
    %c0_0 = arith.constant 0 : index
    %0 = vector.load %arg1[%c0, %c0_0] : memref<2x3072xbf16, #tpu.memory_space<vmem>>, vector<2x3072xbf16>
    %c0_1 = arith.constant 0 : index
    %c0_2 = arith.constant 0 : index
    %1 = vector.load %arg2[%c0_1, %c0_2] : memref<10x3072xbf16, #tpu.memory_space<vmem>>, vector<10x3072xbf16>
    %cst = arith.constant dense<0.000000e+00> : vector<2x10xf32>
    %2 = tpu.matmul %0, %1, %cst {dimension_numbers = #tpu.dot_dimension_numbers<[1], [1], [0], [0], [0, 0, 1, 0], [], []>} : vector<2x3072xbf16>, vector<10x3072xbf16>, vector<2x10xf32> -> vector<2x10xf32>
    %c0_3 = arith.constant 0 : index
    %c0_4 = arith.constant 0 : index
    %3 = vector.load %arg3[%c0_3, %c0_4] : memref<1x10xf32, #tpu.memory_space<vmem>>, vector<1x10xf32>
    %4 = vector.broadcast %3 : vector<1x10xf32> to vector<2x10xf32>
    %5 = arith.addf %2, %4 : vector<2x10xf32>
    %c0_5 = arith.constant 0 : index
    %c0_6 = arith.constant 0 : index
    %6 = vector.load %arg4[%c0_5, %c0_6] : memref<2x10xf32, #tpu.memory_space<vmem>>, vector<2x10xf32>
    tpu.vector_store %arg4[%c0_5, %c0_6], %5 {strides = array<i32>} : memref<2x10xf32, #tpu.memory_space<vmem>>, vector<2x10xf32>,
    return
  }
  func.func @transform_0(%arg0: i32) -> (i32, i32) {
    %c0_i32 = arith.constant 0 : i32
    %c0_i32_0 = arith.constant 0 : i32
    return %arg0, %c0_i32 : i32, i32
  }
  func.func @transform_1(%arg0: i32) -> (i32, i32) {
    %c0_i32 = arith.constant 0 : i32
    %c0_i32_0 = arith.constant 0 : i32
    %c0_i32_1 = arith.constant 0 : i32
    return %c0_i32, %c0_i32_0 : i32, i32
  }
  func.func @transform_2(%arg0: i32) -> (i32, i32) {
    %c0_i32 = arith.constant 0 : i32
    %c0_i32_0 = arith.constant 0 : i32
    %c0_i32_1 = arith.constant 0 : i32
    return %c0_i32, %c0_i32_0 : i32, i32
  }
  func.func @transform_3(%arg0: i32) -> (i32, i32) {
    %c0_i32 = arith.constant 0 : i32
    %c0_i32_0 = arith.constant 0 : i32
    return %arg0, %c0_i32 : i32, i32
  }
}

</mosaic_0001>

<llo_original>
// kernel: tpu_custom_call.1
$region0: #{tpu_custom_call.1}
  #allocation0 [shape = 'u32[]', space=smem, size = 0x4, offset = 0x4, fixed_abs, tag = 'smem constant byte address 0x4 - core index']
  #allocation1 [shape = 'u32[144,128]{1,0:T(1,128)}', space=vmem, size = 0x12000, scoped, tag = 'internal scratch']
  %s0 = inlined_call_operand.hbm [shape: bf16[2,3072], index: 0, kind: input, shape index: {}]
  %s1 = inlined_call_operand.hbm [shape: bf16[10,3072], index: 1, kind: input, shape index: {}]
  %s2 = inlined_call_operand.vmem [shape: f32[1,10], index: 2, kind: input, shape index: {}]
  %s3 = inlined_call_operand.hbm [shape: f32[2,10], index: 3, kind: output, shape index: {}]
  %s4 = sld [smem:[#allocation0]]
  $region30: #{tpu_custom_call.1} parent=0
    _
  %s6 = ssub.s32 1, %s4
  %s7 = scalar_select 0, %s6, %s4
  $region1: #{tpu_custom_call.1} parent=0
    #allocation2 [shape = 'u8[12288]{0}', space=vmem, size = 0x3000, scoped, tag = 'input window, operand 0, single buffered']
    #allocation3 [shape = 's32[1]{0}', space=sflag, size = 0x4, scoped, tag = 'scoped memory for tpu_custom_call.1']
    #allocation4 [shape = 's32[1]{0}', space=sflag, size = 0x4, scoped, tag = 'scoped memory for tpu_custom_call.1']
    #allocation5 [shape = 'u8[98304]{0}', space=vmem, size = 0x18000, scoped, tag = 'input window, operand 1, single buffered']
    #allocation6 [shape = 's32[1]{0}', space=sflag, size = 0x4, scoped, tag = 'scoped memory for tpu_custom_call.1']
    #allocation7 [shape = 'u8[1024]{0}', space=vmem, size = 0x400, scoped, tag = 'output window, operand 0, single buffered']
    %8 = vsyncpa [#allocation3], 0
    %9 = vsyncpa [#allocation6], 0
    %10 = vsyncpa [#allocation4], 0
    // Predicated region
    $region2: #{tpu_custom_call.1} parent=1 // pred_check
      _
    $region3: #{tpu_custom_call.1} parent=1 // pred_check_branch
      %12 = sbr.rel (0) target = $region5
    $region4: #{tpu_custom_call.1} parent=1 // pred_region
      %s14 = ssub.s32 384, 384
      %15 = vsyncadd [#allocation3], %s14
      %s17 = sshll.u32 [#allocation2], 4
      %s18 = int_to_ptr.vmem [resolvable:$true] %s17
      %20 = dma.hbm_to_vmem [thread:$0]  %s0, 384, %s18, [#allocation3]
    $region5: #{tpu_custom_call.1} parent=1 // pred_fallthru
      _
    // Predicated region
    $region6: #{tpu_custom_call.1} parent=1 // pred_check
      _
    $region7: #{tpu_custom_call.1} parent=1 // pred_check_branch
      %22 = sbr.rel (0) target = $region9
    $region8: #{tpu_custom_call.1} parent=1 // pred_region
      %s24 = ssub.s32 3072, 3072
      %25 = vsyncadd [#allocation6], %s24
      %s26 = sshll.u32 [#allocation5], 4
      %s27 = int_to_ptr.vmem [resolvable:$true] %s26
      %32 = dma.hbm_to_vmem [thread:$0]  %s1, 3072, %s27, [#allocation6], 1536, 1536, 96
    $region9: #{tpu_custom_call.1} parent=1 // pred_fallthru
      _
    // Predicated region
    $region10: #{tpu_custom_call.1} parent=1 // pred_check
      _
    $region11: #{tpu_custom_call.1} parent=1 // pred_check_branch
      %34 = sbr.rel (0) target = $region13
    $region12: #{tpu_custom_call.1} parent=1 // pred_region
      _
    $region13: #{tpu_custom_call.1} parent=1 // pred_fallthru
      _
    // Predicated region
    $region14: #{tpu_custom_call.1} parent=1 // pred_check
      _
    $region15: #{tpu_custom_call.1} parent=1 // pred_check_branch
      %36 = sbr.rel (0) target = $region17
    $region16: #{tpu_custom_call.1} parent=1 // pred_region
      %37 = dma.done [#allocation3], 384
    $region17: #{tpu_custom_call.1} parent=1 // pred_fallthru
      _
    // Predicated region
    $region18: #{tpu_custom_call.1} parent=1 // pred_check
      _
    $region19: #{tpu_custom_call.1} parent=1 // pred_check_branch
      %39 = sbr.rel (0) target = $region21
    $region20: #{tpu_custom_call.1} parent=1 // pred_region
      %40 = dma.done [#allocation6], 3072
    $region21: #{tpu_custom_call.1} parent=1 // pred_fallthru
      _
    %v42 = vld [vmem:[#allocation2] sm:$0xff]
    %v43 = vld [vmem:[#allocation2 + $0x8] sm:$0xff]
    %v44 = vld [vmem:[#allocation2 + $0x10] sm:$0xff]
    %v45 = vld [vmem:[#allocation5] sm:$0xff]
    %v46 = vld [vmem:[#allocation5 + $0x8] sm:$0xff]
    %v47 = vld [vmem:[#allocation5 + $0x10] sm:$0xff]
    %v48 = vld [vmem:[#allocation5 + $0x18] sm:$0xff]
    %v49 = vld [vmem:[#allocation5 + $0x20] sm:$0xff]
    %v50 = vld [vmem:[#allocation5 + $0x28] sm:$0xff]
    %v51 = vld [vmem:[#allocation5 + $0x30] sm:$0xff]
    %v52 = vld [vmem:[#allocation5 + $0x38] sm:$0xff]
    %v53 = vld [vmem:[#allocation5 + $0x40] sm:$0xff]
    %v54 = vld [vmem:[#allocation5 + $0x48] sm:$0xff]
    %v55 = vld [vmem:[#allocation5 + $0x50] sm:$0xff]
    %v56 = vld [vmem:[#allocation5 + $0x58] sm:$0xff]
    %v57 = vld [vmem:[#allocation5 + $0x60] sm:$0x11]
    %v58 = vld [vmem:[#allocation5 + $0x68] sm:$0x11]
    %v59 = vld [vmem:[#allocation5 + $0x70] sm:$0x11]
    %v60 = vld [vmem:[#allocation5 + $0x78] sm:$0x11]
    %v61 = vld [vmem:[#allocation5 + $0x80] sm:$0x11]
    %v62 = vld [vmem:[#allocation5 + $0x88] sm:$0x11]
    %v63 = vld [vmem:[#allocation5 + $0x90] sm:$0x11]
    %v64 = vld [vmem:[#allocation5 + $0x98] sm:$0x11]
    %v65 = vld [vmem:[#allocation5 + $0xa0] sm:$0x11]
    %v66 = vld [vmem:[#allocation5 + $0xa8] sm:$0x11]
    %v67 = vld [vmem:[#allocation5 + $0xb0] sm:$0x11]
    %v68 = vld [vmem:[#allocation5 + $0xb8] sm:$0x11]
    %v69 = vld [vmem:[%s2] sm:$0x1]
    %v71 = vlaneseq
    %v72 = vshrl.u32 %v71, 7
    %v73 = vsub.s32 0, %v72
    %v74 = vrot.slane %v69, %v73
    %v79 = vcombine.high %v42, %v42
    %v81 = vunpack.c.l.s4 1966171168
    %v82 = vunpack.c.0.s8 %v81
    %v83 = vlaneseq
    %v84 = vshrl.u32 %v83, 7
    %v85 = vsub.s32 %v82, %v84
    %v86 = vrot.slane %v42, %v85
    %v88 = vunpack.c.l.s4 1966171168
    %v89 = vunpack.c.0.s8 %v88
    %v90 = vlaneseq
    %v91 = vshrl.u32 %v90, 7
    %v92 = vsub.s32 %v89, %v91
    %v93 = vrot.slane %v79, %v92
    %v94 = vcombine.high %v86, %v86
    %v95 = vcombine.high %v93, %v93
    %v97 = vunpack.c.l.s4 1966171168
    %v98 = vunpack.c.0.s8 %v97
    %v99 = vlaneseq
    %v100 = vshrl.u32 %v99, 7
    %v101 = vsub.s32 %v98, %v100
    %v102 = vrot.slane %v86, %v101
    %v104 = vunpack.c.l.s4 1966171168
    %v105 = vunpack.c.0.s8 %v104
    %v106 = vlaneseq
    %v107 = vshrl.u32 %v106, 7
    %v108 = vsub.s32 %v105, %v107
    %v109 = vrot.slane %v93, %v108
    %v111 = vunpack.c.l.s4 1966171168
    %v112 = vunpack.c.0.s8 %v111
    %v113 = vlaneseq
    %v114 = vshrl.u32 %v113, 7
    %v115 = vsub.s32 %v112, %v114
    %v116 = vrot.slane %v94, %v115
    %v118 = vunpack.c.l.s4 1966171168
    %v119 = vunpack.c.0.s8 %v118
    %v120 = vlaneseq
    %v121 = vshrl.u32 %v120, 7
    %v122 = vsub.s32 %v119, %v121
    %v123 = vrot.slane %v95, %v122
    %v124 = vcombine.high %v102, %v102
    %v125 = vcombine.high %v109, %v109
    %v126 = vcombine.high %v116, %v116
    %v127 = vcombine.high %v123, %v123
    %v128 = vcombine.high %v43, %v43
    %v130 = vunpack.c.l.s4 1966171168
    %v131 = vunpack.c.0.s8 %v130
    %v132 = vlaneseq
    %v133 = vshrl.u32 %v132, 7
    %v134 = vsub.s32 %v131, %v133
    %v135 = vrot.slane %v43, %v134
    %v137 = vunpack.c.l.s4 1966171168
    %v138 = vunpack.c.0.s8 %v137
    %v139 = vlaneseq
    %v140 = vshrl.u32 %v139, 7
    %v141 = vsub.s32 %v138, %v140
    %v142 = vrot.slane %v128, %v141
    %v143 = vcombine.high %v135, %v135
    %v144 = vcombine.high %v142, %v142
    %v146 = vunpack.c.l.s4 1966171168
    %v147 = vunpack.c.0.s8 %v146
    %v148 = vlaneseq
    %v149 = vshrl.u32 %v148, 7
    %v150 = vsub.s32 %v147, %v149
    %v151 = vrot.slane %v135, %v150
    %v153 = vunpack.c.l.s4 1966171168
    %v154 = vunpack.c.0.s8 %v153
    %v155 = vlaneseq
    %v156 = vshrl.u32 %v155, 7
    %v157 = vsub.s32 %v154, %v156
    %v158 = vrot.slane %v142, %v157
    %v160 = vunpack.c.l.s4 1966171168
    %v161 = vunpack.c.0.s8 %v160
    %v162 = vlaneseq
    %v163 = vshrl.u32 %v162, 7
    %v164 = vsub.s32 %v161, %v163
    %v165 = vrot.slane %v143, %v164
    %v167 = vunpack.c.l.s4 1966171168
    %v168 = vunpack.c.0.s8 %v167
    %v169 = vlaneseq
    %v170 = vshrl.u32 %v169, 7
    %v171 = vsub.s32 %v168, %v170
    %v172 = vrot.slane %v144, %v171
    %v173 = vcombine.high %v151, %v151
    %v174 = vcombine.high %v158, %v158
    %v175 = vcombine.high %v165, %v165
    %v176 = vcombine.high %v172, %v172
    %v177 = vcombine.high %v44, %v44
    %v179 = vunpack.c.l.s4 1966171168
    %v180 = vunpack.c.0.s8 %v179
    %v181 = vlaneseq
    %v182 = vshrl.u32 %v181, 7
    %v183 = vsub.s32 %v180, %v182
    %v184 = vrot.slane %v44, %v183
    %v186 = vunpack.c.l.s4 1966171168
    %v187 = vunpack.c.0.s8 %v186
    %v188 = vlaneseq
    %v189 = vshrl.u32 %v188, 7
    %v190 = vsub.s32 %v187, %v189
    %v191 = vrot.slane %v177, %v190
    %v192 = vcombine.high %v184, %v184
    %v193 = vcombine.high %v191, %v191
    %v195 = vunpack.c.l.s4 1966171168
    %v196 = vunpack.c.0.s8 %v195
    %v197 = vlaneseq
    %v198 = vshrl.u32 %v197, 7
    %v199 = vsub.s32 %v196, %v198
    %v200 = vrot.slane %v184, %v199
    %v202 = vunpack.c.l.s4 1966171168
    %v203 = vunpack.c.0.s8 %v202
    %v204 = vlaneseq
    %v205 = vshrl.u32 %v204, 7
    %v206 = vsub.s32 %v203, %v205
    %v207 = vrot.slane %v191, %v206
    %v209 = vunpack.c.l.s4 1966171168
    %v210 = vunpack.c.0.s8 %v209
    %v211 = vlaneseq
    %v212 = vshrl.u32 %v211, 7
    %v213 = vsub.s32 %v210, %v212
    %v214 = vrot.slane %v192, %v213
    %v216 = vunpack.c.l.s4 1966171168
    %v217 = vunpack.c.0.s8 %v216
    %v218 = vlaneseq
    %v219 = vshrl.u32 %v218, 7
    %v220 = vsub.s32 %v217, %v219
    %v221 = vrot.slane %v193, %v220
    %v222 = vcombine.high %v200, %v200
    %v223 = vcombine.high %v207, %v207
    %v224 = vcombine.high %v214, %v214
    %v225 = vcombine.high %v221, %v221
    %v274 = vunpack.c.l.b16 %v45
    %v275 = vunpack.c.h.b16 %v45
    %v276 = vunpack.c.l.b16 %v46
    %v277 = vunpack.c.h.b16 %v46
    %v278 = vunpack.c.l.b16 %v47
    %v279 = vunpack.c.h.b16 %v47
    %v280 = vunpack.c.l.b16 %v48
    %v281 = vunpack.c.h.b16 %v48
    %v282 = vunpack.c.l.b16 %v49
    %v283 = vunpack.c.h.b16 %v49
    %v284 = vunpack.c.l.b16 %v50
    %v285 = vunpack.c.h.b16 %v50
    %v286 = vunpack.c.l.b16 %v51
    %v287 = vunpack.c.h.b16 %v51
    %v288 = vunpack.c.l.b16 %v52
    %v289 = vunpack.c.h.b16 %v52
    %v290 = vunpack.c.l.b16 %v53
    %v291 = vunpack.c.h.b16 %v53
    %v292 = vunpack.c.l.b16 %v54
    %v293 = vunpack.c.h.b16 %v54
    %v294 = vunpack.c.l.b16 %v55
    %v295 = vunpack.c.h.b16 %v55
    %v296 = vunpack.c.l.b16 %v56
    %v297 = vunpack.c.h.b16 %v56
    %v298 = vunpack.c.l.b16 %v57
    %v299 = vunpack.c.h.b16 %v57
    %v300 = vunpack.c.l.b16 %v58
    %v301 = vunpack.c.h.b16 %v58
    %v302 = vunpack.c.l.b16 %v59
    %v303 = vunpack.c.h.b16 %v59
    %v304 = vunpack.c.l.b16 %v60
    %v305 = vunpack.c.h.b16 %v60
    %v306 = vunpack.c.l.b16 %v61
    %v307 = vunpack.c.h.b16 %v61
    %v308 = vunpack.c.l.b16 %v62
    %v309 = vunpack.c.h.b16 %v62
    %v310 = vunpack.c.l.b16 %v63
    %v311 = vunpack.c.h.b16 %v63
    %v312 = vunpack.c.l.b16 %v64
    %v313 = vunpack.c.h.b16 %v64
    %v314 = vunpack.c.l.b16 %v65
    %v315 = vunpack.c.h.b16 %v65
    %v316 = vunpack.c.l.b16 %v66
    %v317 = vunpack.c.h.b16 %v66
    %v318 = vunpack.c.l.b16 %v67
    %v319 = vunpack.c.h.b16 %v67
    %v320 = vunpack.c.l.b16 %v68
    %v321 = vunpack.c.h.b16 %v68
    %v322 = vpack.c.b16 %v298, %v274
    %v323 = vpack.c.b16 %v299, %v275
    %v324 = vpack.c.b16 %v300, %v276
    %v325 = vpack.c.b16 %v301, %v277
    %v326 = vpack.c.b16 %v302, %v278
    %v327 = vpack.c.b16 %v303, %v279
    %v328 = vpack.c.b16 %v304, %v280
    %v329 = vpack.c.b16 %v305, %v281
    %v330 = vpack.c.b16 %v306, %v282
    %v331 = vpack.c.b16 %v307, %v283
    %v332 = vpack.c.b16 %v308, %v284
    %v333 = vpack.c.b16 %v309, %v285
    %v334 = vpack.c.b16 %v310, %v286
    %v335 = vpack.c.b16 %v311, %v287
    %v336 = vpack.c.b16 %v312, %v288
    %v337 = vpack.c.b16 %v313, %v289
    %v338 = vpack.c.b16 %v314, %v290
    %v339 = vpack.c.b16 %v315, %v291
    %v340 = vpack.c.b16 %v316, %v292
    %v341 = vpack.c.b16 %v317, %v293
    %v342 = vpack.c.b16 %v318, %v294
    %v343 = vpack.c.b16 %v319, %v295
    %v344 = vpack.c.b16 %v320, %v296
    %v345 = vpack.c.b16 %v321, %v297
    %370 = vmatprep.subr.bf16.mxu0 0
    %371 = vmatpush1.bf16.xpose.msra.mxu0 0
    %372 = vmatprep.subr.bf16.mxu0 0
    %373 = vmatpush1.bf16.xpose.msra.mxu0 0
    %374 = vmatprep.subr.bf16.mxu0 0
    %375 = vmatpush1.bf16.xpose.msra.mxu0 0
    %376 = vmatprep.subr.bf16.mxu0 0
    %377 = vmatpush1.bf16.xpose.msra.mxu0 0
    %378 = vmatprep.subr.bf16.mxu0 0
    %379 = vmatpush1.bf16.xpose.msra.mxu0 0
    %380 = vmatprep.subr.bf16.mxu0 0
    %381 = vmatpush1.bf16.xpose.msra.mxu0 0
    %382 = vmatprep.subr.bf16.mxu0 0
    %383 = vmatpush1.bf16.xpose.msra.mxu0 0
    %384 = vmatprep.subr.bf16.mxu0 %v323
    %385 = vmatpush1.bf16.xpose.msra.mxu0 %v322
    %386 = vmatprep.subr.bf16.mxu0 0
    %387 = vmatpush2.bf16.xpose.msra.mxu0 0
    %388 = vmatprep.subr.bf16.mxu0 0
    %389 = vmatpush2.bf16.xpose.msra.mxu0 0
    %390 = vmatprep.subr.bf16.mxu0 0
    %391 = vmatpush2.bf16.xpose.msra.mxu0 0
    %392 = vmatprep.subr.bf16.mxu0 0
    %393 = vmatpush2.bf16.xpose.msra.mxu0 0
    %394 = vmatprep.subr.bf16.mxu0 0
    %395 = vmatpush2.bf16.xpose.msra.mxu0 0
    %396 = vmatprep.subr.bf16.mxu0 0
    %397 = vmatpush2.bf16.xpose.msra.mxu0 0
    %398 = vmatprep.subr.bf16.mxu0 0
    %399 = vmatpush2.bf16.xpose.msra.mxu0 0
    %400 = vmatprep.subr.bf16.mxu0 0
    %401 = vmatpush2.bf16.xpose.msra.mxu0 0
    %402 = vmatprep.mubr.bf16.mxu0 %v116
    %403 = vmatmul.mubr.bf16.gmra.mxu0 %v102
    %v404 = vpop.f32.mrf.mxu0
    %v405 = vadd.f32 %v74, %v404
    %v406 = vpop.f32.mrf.mxu0
    %v407 = vpop.f32.mrf.mxu0
    %v408 = vpop.f32.mrf.mxu0
    %409 = vdwg.mxu0
    %410 = vmatprep.subr.bf16.mxu0 0
    %411 = vmatpush1.bf16.xpose.msra.mxu0 0
    %412 = vmatprep.subr.bf16.mxu0 0
    %413 = vmatpush1.bf16.xpose.msra.mxu0 0
    %414 = vmatprep.subr.bf16.mxu0 0
    %415 = vmatpush1.bf16.xpose.msra.mxu0 0
    %416 = vmatprep.subr.bf16.mxu0 0
    %417 = vmatpush1.bf16.xpose.msra.mxu0 0
    %418 = vmatprep.subr.bf16.mxu0 0
    %419 = vmatpush1.bf16.xpose.msra.mxu0 0
    %420 = vmatprep.subr.bf16.mxu0 0
    %421 = vmatpush1.bf16.xpose.msra.mxu0 0
    %422 = vmatprep.subr.bf16.mxu0 0
    %423 = vmatpush1.bf16.xpose.msra.mxu0 0
    %424 = vmatprep.subr.bf16.mxu0 %v325
    %425 = vmatpush1.bf16.xpose.msra.mxu0 %v324
    %426 = vmatprep.subr.bf16.mxu0 0
    %427 = vmatpush2.bf16.xpose.msra.mxu0 0
    %428 = vmatprep.subr.bf16.mxu0 0
    %429 = vmatpush2.bf16.xpose.msra.mxu0 0
    %430 = vmatprep.subr.bf16.mxu0 0
    %431 = vmatpush2.bf16.xpose.msra.mxu0 0
    %432 = vmatprep.subr.bf16.mxu0 0
    %433 = vmatpush2.bf16.xpose.msra.mxu0 0
    %434 = vmatprep.subr.bf16.mxu0 0
    %435 = vmatpush2.bf16.xpose.msra.mxu0 0
    %436 = vmatprep.subr.bf16.mxu0 0
    %437 = vmatpush2.bf16.xpose.msra.mxu0 0
    %438 = vmatprep.subr.bf16.mxu0 0
    %439 = vmatpush2.bf16.xpose.msra.mxu0 0
    %440 = vmatprep.subr.bf16.mxu0 0
    %441 = vmatpush2.bf16.xpose.msra.mxu0 0
    %442 = vmatprep.mubr.bf16.mxu0 %v126
    %443 = vmatmul.mubr.bf16.gmra.mxu0 %v124
    %v444 = vpop.f32.mrf.mxu0
    %v445 = vadd.f32 %v405, %v444
    %v446 = vpop.f32.mrf.mxu0
    %v447 = vpop.f32.mrf.mxu0
    %v448 = vpop.f32.mrf.mxu0
    %449 = vdwg.mxu0
    %450 = vmatprep.subr.bf16.mxu0 0
    %451 = vmatpush1.bf16.xpose.msra.mxu0 0
    %452 = vmatprep.subr.bf16.mxu0 0
    %453 = vmatpush1.bf16.xpose.msra.mxu0 0
    %454 = vmatprep.subr.bf16.mxu0 0
    %455 = vmatpush1.bf16.xpose.msra.mxu0 0
    %456 = vmatprep.subr.bf16.mxu0 0
    %457 = vmatpush1.bf16.xpose.msra.mxu0 0
    %458 = vmatprep.subr.bf16.mxu0 0
    %459 = vmatpush1.bf16.xpose.msra.mxu0 0
    %460 = vmatprep.subr.bf16.mxu0 0
    %461 = vmatpush1.bf16.xpose.msra.mxu0 0
    %462 = vmatprep.subr.bf16.mxu0 0
    %463 = vmatpush1.bf16.xpose.msra.mxu0 0
    %464 = vmatprep.subr.bf16.mxu0 %v327
    %465 = vmatpush1.bf16.xpose.msra.mxu0 %v326
    %466 = vmatprep.subr.bf16.mxu0 0
    %467 = vmatpush2.bf16.xpose.msra.mxu0 0
    %468 = vmatprep.subr.bf16.mxu0 0
    %469 = vmatpush2.bf16.xpose.msra.mxu0 0
    %470 = vmatprep.subr.bf16.mxu0 0
    %471 = vmatpush2.bf16.xpose.msra.mxu0 0
    %472 = vmatprep.subr.bf16.mxu0 0
    %473 = vmatpush2.bf16.xpose.msra.mxu0 0
    %474 = vmatprep.subr.bf16.mxu0 0
    %475 = vmatpush2.bf16.xpose.msra.mxu0 0
    %476 = vmatprep.subr.bf16.mxu0 0
    %477 = vmatpush2.bf16.xpose.msra.mxu0 0
    %478 = vmatprep.subr.bf16.mxu0 0
    %479 = vmatpush2.bf16.xpose.msra.mxu0 0
    %480 = vmatprep.subr.bf16.mxu0 0
    %481 = vmatpush2.bf16.xpose.msra.mxu0 0
    %482 = vmatprep.mubr.bf16.mxu0 %v123
    %483 = vmatmul.mubr.bf16.gmra.mxu0 %v109
    %v484 = vpop.f32.mrf.mxu0
    %v485 = vadd.f32 %v445, %v484
    %v486 = vpop.f32.mrf.mxu0
    %v487 = vpop.f32.mrf.mxu0
    %v488 = vpop.f32.mrf.mxu0
    %489 = vdwg.mxu0
    %490 = vmatprep.subr.bf16.mxu0 0
    %491 = vmatpush1.bf16.xpose.msra.mxu0 0
    %492 = vmatprep.subr.bf16.mxu0 0
    %493 = vmatpush1.bf16.xpose.msra.mxu0 0
    %494 = vmatprep.subr.bf16.mxu0 0
    %495 = vmatpush1.bf16.xpose.msra.mxu0 0
    %496 = vmatprep.subr.bf16.mxu0 0
    %497 = vmatpush1.bf16.xpose.msra.mxu0 0
    %498 = vmatprep.subr.bf16.mxu0 0
    %499 = vmatpush1.bf16.xpose.msra.mxu0 0
    %500 = vmatprep.subr.bf16.mxu0 0
    %501 = vmatpush1.bf16.xpose.msra.mxu0 0
    %502 = vmatprep.subr.bf16.mxu0 0
    %503 = vmatpush1.bf16.xpose.msra.mxu0 0
    %504 = vmatprep.subr.bf16.mxu0 %v329
    %505 = vmatpush1.bf16.xpose.msra.mxu0 %v328
    %506 = vmatprep.subr.bf16.mxu0 0
    %507 = vmatpush2.bf16.xpose.msra.mxu0 0
    %508 = vmatprep.subr.bf16.mxu0 0
    %509 = vmatpush2.bf16.xpose.msra.mxu0 0
    %510 = vmatprep.subr.bf16.mxu0 0
    %511 = vmatpush2.bf16.xpose.msra.mxu0 0
    %512 = vmatprep.subr.bf16.mxu0 0
    %513 = vmatpush2.bf16.xpose.msra.mxu0 0
    %514 = vmatprep.subr.bf16.mxu0 0
    %515 = vmatpush2.bf16.xpose.msra.mxu0 0
    %516 = vmatprep.subr.bf16.mxu0 0
    %517 = vmatpush2.bf16.xpose.msra.mxu0 0
    %518 = vmatprep.subr.bf16.mxu0 0
    %519 = vmatpush2.bf16.xpose.msra.mxu0 0
    %520 = vmatprep.subr.bf16.mxu0 0
    %521 = vmatpush2.bf16.xpose.msra.mxu0 0
    %522 = vmatprep.mubr.bf16.mxu0 %v127
    %523 = vmatmul.mubr.bf16.gmra.mxu0 %v125
    %v524 = vpop.f32.mrf.mxu0
    %v525 = vadd.f32 %v485, %v524
    %v526 = vpop.f32.mrf.mxu0
    %v527 = vpop.f32.mrf.mxu0
    %v528 = vpop.f32.mrf.mxu0
    %529 = vdwg.mxu0
    %530 = vmatprep.subr.bf16.mxu0 0
    %531 = vmatpush1.bf16.xpose.msra.mxu0 0
    %532 = vmatprep.subr.bf16.mxu0 0
    %533 = vmatpush1.bf16.xpose.msra.mxu0 0
    %534 = vmatprep.subr.bf16.mxu0 0
    %535 = vmatpush1.bf16.xpose.msra.mxu0 0
    %536 = vmatprep.subr.bf16.mxu0 0
    %537 = vmatpush1.bf16.xpose.msra.mxu0 0
    %538 = vmatprep.subr.bf16.mxu0 0
    %539 = vmatpush1.bf16.xpose.msra.mxu0 0
    %540 = vmatprep.subr.bf16.mxu0 0
    %541 = vmatpush1.bf16.xpose.msra.mxu0 0
    %542 = vmatprep.subr.bf16.mxu0 0
    %543 = vmatpush1.bf16.xpose.msra.mxu0 0
    %544 = vmatprep.subr.bf16.mxu0 %v331
    %545 = vmatpush1.bf16.xpose.msra.mxu0 %v330
    %546 = vmatprep.subr.bf16.mxu0 0
    %547 = vmatpush2.bf16.xpose.msra.mxu0 0
    %548 = vmatprep.subr.bf16.mxu0 0
    %549 = vmatpush2.bf16.xpose.msra.mxu0 0
    %550 = vmatprep.subr.bf16.mxu0 0
    %551 = vmatpush2.bf16.xpose.msra.mxu0 0
    %552 = vmatprep.subr.bf16.mxu0 0
    %553 = vmatpush2.bf16.xpose.msra.mxu0 0
    %554 = vmatprep.subr.bf16.mxu0 0
    %555 = vmatpush2.bf16.xpose.msra.mxu0 0
    %556 = vmatprep.subr.bf16.mxu0 0
    %557 = vmatpush2.bf16.xpose.msra.mxu0 0
    %558 = vmatprep.subr.bf16.mxu0 0
    %559 = vmatpush2.bf16.xpose.msra.mxu0 0
    %560 = vmatprep.subr.bf16.mxu0 0
    %561 = vmatpush2.bf16.xpose.msra.mxu0 0
    %562 = vmatprep.mubr.bf16.mxu0 %v165
    %563 = vmatmul.mubr.bf16.gmra.mxu0 %v151
    %v564 = vpop.f32.mrf.mxu0
    %v565 = vadd.f32 %v525, %v564
    %v566 = vpop.f32.mrf.mxu0
    %v567 = vpop.f32.mrf.mxu0
    %v568 = vpop.f32.mrf.mxu0
    %569 = vdwg.mxu0
    %570 = vmatprep.subr.bf16.mxu0 0
    %571 = vmatpush1.bf16.xpose.msra.mxu0 0
    %572 = vmatprep.subr.bf16.mxu0 0
    %573 = vmatpush1.bf16.xpose.msra.mxu0 0
    %574 = vmatprep.subr.bf16.mxu0 0
    %575 = vmatpush1.bf16.xpose.msra.mxu0 0
    %576 = vmatprep.subr.bf16.mxu0 0
    %577 = vmatpush1.bf16.xpose.msra.mxu0 0
    %578 = vmatprep.subr.bf16.mxu0 0
    %579 = vmatpush1.bf16.xpose.msra.mxu0 0
    %580 = vmatprep.subr.bf16.mxu0 0
    %581 = vmatpush1.bf16.xpose.msra.mxu0 0
    %582 = vmatprep.subr.bf16.mxu0 0
    %583 = vmatpush1.bf16.xpose.msra.mxu0 0
    %584 = vmatprep.subr.bf16.mxu0 %v333
    %585 = vmatpush1.bf16.xpose.msra.mxu0 %v332
    %586 = vmatprep.subr.bf16.mxu0 0
    %587 = vmatpush2.bf16.xpose.msra.mxu0 0
    %588 = vmatprep.subr.bf16.mxu0 0
    %589 = vmatpush2.bf16.xpose.msra.mxu0 0
    %590 = vmatprep.subr.bf16.mxu0 0
    %591 = vmatpush2.bf16.xpose.msra.mxu0 0
    %592 = vmatprep.subr.bf16.mxu0 0
    %593 = vmatpush2.bf16.xpose.msra.mxu0 0
    %594 = vmatprep.subr.bf16.mxu0 0
    %595 = vmatpush2.bf16.xpose.msra.mxu0 0
    %596 = vmatprep.subr.bf16.mxu0 0
    %597 = vmatpush2.bf16.xpose.msra.mxu0 0
    %598 = vmatprep.subr.bf16.mxu0 0
    %599 = vmatpush2.bf16.xpose.msra.mxu0 0
    %600 = vmatprep.subr.bf16.mxu0 0
    %601 = vmatpush2.bf16.xpose.msra.mxu0 0
    %602 = vmatprep.mubr.bf16.mxu0 %v175
    %603 = vmatmul.mubr.bf16.gmra.mxu0 %v173
    %v604 = vpop.f32.mrf.mxu0
    %v605 = vadd.f32 %v565, %v604
    %v606 = vpop.f32.mrf.mxu0
    %v607 = vpop.f32.mrf.mxu0
    %v608 = vpop.f32.mrf.mxu0
    %609 = vdwg.mxu0
    %610 = vmatprep.subr.bf16.mxu0 0
    %611 = vmatpush1.bf16.xpose.msra.mxu0 0
    %612 = vmatprep.subr.bf16.mxu0 0
    %613 = vmatpush1.bf16.xpose.msra.mxu0 0
    %614 = vmatprep.subr.bf16.mxu0 0
    %615 = vmatpush1.bf16.xpose.msra.mxu0 0
    %616 = vmatprep.subr.bf16.mxu0 0
    %617 = vmatpush1.bf16.xpose.msra.mxu0 0
    %618 = vmatprep.subr.bf16.mxu0 0
    %619 = vmatpush1.bf16.xpose.msra.mxu0 0
    %620 = vmatprep.subr.bf16.mxu0 0
    %621 = vmatpush1.bf16.xpose.msra.mxu0 0
    %622 = vmatprep.subr.bf16.mxu0 0
    %623 = vmatpush1.bf16.xpose.msra.mxu0 0
    %624 = vmatprep.subr.bf16.mxu0 %v335
    %625 = vmatpush1.bf16.xpose.msra.mxu0 %v334
    %626 = vmatprep.subr.bf16.mxu0 0
    %627 = vmatpush2.bf16.xpose.msra.mxu0 0
    %628 = vmatprep.subr.bf16.mxu0 0
    %629 = vmatpush2.bf16.xpose.msra.mxu0 0
    %630 = vmatprep.subr.bf16.mxu0 0
    %631 = vmatpush2.bf16.xpose.msra.mxu0 0
    %632 = vmatprep.subr.bf16.mxu0 0
    %633 = vmatpush2.bf16.xpose.msra.mxu0 0
    %634 = vmatprep.subr.bf16.mxu0 0
    %635 = vmatpush2.bf16.xpose.msra.mxu0 0
    %636 = vmatprep.subr.bf16.mxu0 0
    %637 = vmatpush2.bf16.xpose.msra.mxu0 0
    %638 = vmatprep.subr.bf16.mxu0 0
    %639 = vmatpush2.bf16.xpose.msra.mxu0 0
    %640 = vmatprep.subr.bf16.mxu0 0
    %641 = vmatpush2.bf16.xpose.msra.mxu0 0
    %642 = vmatprep.mubr.bf16.mxu0 %v172
    %643 = vmatmul.mubr.bf16.gmra.mxu0 %v158
    %v644 = vpop.f32.mrf.mxu0
    %v645 = vadd.f32 %v605, %v644
    %v646 = vpop.f32.mrf.mxu0
    %v647 = vpop.f32.mrf.mxu0
    %v648 = vpop.f32.mrf.mxu0
    %649 = vdwg.mxu0
    %650 = vmatprep.subr.bf16.mxu0 0
    %651 = vmatpush1.bf16.xpose.msra.mxu0 0
    %652 = vmatprep.subr.bf16.mxu0 0
    %653 = vmatpush1.bf16.xpose.msra.mxu0 0
    %654 = vmatprep.subr.bf16.mxu0 0
    %655 = vmatpush1.bf16.xpose.msra.mxu0 0
    %656 = vmatprep.subr.bf16.mxu0 0
    %657 = vmatpush1.bf16.xpose.msra.mxu0 0
    %658 = vmatprep.subr.bf16.mxu0 0
    %659 = vmatpush1.bf16.xpose.msra.mxu0 0
    %660 = vmatprep.subr.bf16.mxu0 0
    %661 = vmatpush1.bf16.xpose.msra.mxu0 0
    %662 = vmatprep.subr.bf16.mxu0 0
    %663 = vmatpush1.bf16.xpose.msra.mxu0 0
    %664 = vmatprep.subr.bf16.mxu0 %v337
    %665 = vmatpush1.bf16.xpose.msra.mxu0 %v336
    %666 = vmatprep.subr.bf16.mxu0 0
    %667 = vmatpush2.bf16.xpose.msra.mxu0 0
    %668 = vmatprep.subr.bf16.mxu0 0
    %669 = vmatpush2.bf16.xpose.msra.mxu0 0
    %670 = vmatprep.subr.bf16.mxu0 0
    %671 = vmatpush2.bf16.xpose.msra.mxu0 0
    %672 = vmatprep.subr.bf16.mxu0 0
    %673 = vmatpush2.bf16.xpose.msra.mxu0 0
    %674 = vmatprep.subr.bf16.mxu0 0
    %675 = vmatpush2.bf16.xpose.msra.mxu0 0
    %676 = vmatprep.subr.bf16.mxu0 0
    %677 = vmatpush2.bf16.xpose.msra.mxu0 0
    %678 = vmatprep.subr.bf16.mxu0 0
    %679 = vmatpush2.bf16.xpose.msra.mxu0 0
    %680 = vmatprep.subr.bf16.mxu0 0
    %681 = vmatpush2.bf16.xpose.msra.mxu0 0
    %682 = vmatprep.mubr.bf16.mxu0 %v176
    %683 = vmatmul.mubr.bf16.gmra.mxu0 %v174
    %v684 = vpop.f32.mrf.mxu0
    %v685 = vadd.f32 %v645, %v684
    %v686 = vpop.f32.mrf.mxu0
    %v687 = vpop.f32.mrf.mxu0
    %v688 = vpop.f32.mrf.mxu0
    %689 = vdwg.mxu0
    %690 = vmatprep.subr.bf16.mxu0 0
    %691 = vmatpush1.bf16.xpose.msra.mxu0 0
    %692 = vmatprep.subr.bf16.mxu0 0
    %693 = vmatpush1.bf16.xpose.msra.mxu0 0
    %694 = vmatprep.subr.bf16.mxu0 0
    %695 = vmatpush1.bf16.xpose.msra.mxu0 0
    %696 = vmatprep.subr.bf16.mxu0 0
    %697 = vmatpush1.bf16.xpose.msra.mxu0 0
    %698 = vmatprep.subr.bf16.mxu0 0
    %699 = vmatpush1.bf16.xpose.msra.mxu0 0
    %700 = vmatprep.subr.bf16.mxu0 0
    %701 = vmatpush1.bf16.xpose.msra.mxu0 0
    %702 = vmatprep.subr.bf16.mxu0 0
    %703 = vmatpush1.bf16.xpose.msra.mxu0 0
    %704 = vmatprep.subr.bf16.mxu0 %v339
    %705 = vmatpush1.bf16.xpose.msra.mxu0 %v338
    %706 = vmatprep.subr.bf16.mxu0 0
    %707 = vmatpush2.bf16.xpose.msra.mxu0 0
    %708 = vmatprep.subr.bf16.mxu0 0
    %709 = vmatpush2.bf16.xpose.msra.mxu0 0
    %710 = vmatprep.subr.bf16.mxu0 0
    %711 = vmatpush2.bf16.xpose.msra.mxu0 0
    %712 = vmatprep.subr.bf16.mxu0 0
    %713 = vmatpush2.bf16.xpose.msra.mxu0 0
    %714 = vmatprep.subr.bf16.mxu0 0
    %715 = vmatpush2.bf16.xpose.msra.mxu0 0
    %716 = vmatprep.subr.bf16.mxu0 0
    %717 = vmatpush2.bf16.xpose.msra.mxu0 0
    %718 = vmatprep.subr.bf16.mxu0 0
    %719 = vmatpush2.bf16.xpose.msra.mxu0 0
    %720 = vmatprep.subr.bf16.mxu0 0
    %721 = vmatpush2.bf16.xpose.msra.mxu0 0
    %722 = vmatprep.mubr.bf16.mxu0 %v214
    %723 = vmatmul.mubr.bf16.gmra.mxu0 %v200
    %v724 = vpop.f32.mrf.mxu0
    %v725 = vadd.f32 %v685, %v724
    %v726 = vpop.f32.mrf.mxu0
    %v727 = vpop.f32.mrf.mxu0
    %v728 = vpop.f32.mrf.mxu0
    %729 = vdwg.mxu0
    %730 = vmatprep.subr.bf16.mxu0 0
    %731 = vmatpush1.bf16.xpose.msra.mxu0 0
    %732 = vmatprep.subr.bf16.mxu0 0
    %733 = vmatpush1.bf16.xpose.msra.mxu0 0
    %734 = vmatprep.subr.bf16.mxu0 0
    %735 = vmatpush1.bf16.xpose.msra.mxu0 0
    %736 = vmatprep.subr.bf16.mxu0 0
    %737 = vmatpush1.bf16.xpose.msra.mxu0 0
    %738 = vmatprep.subr.bf16.mxu0 0
    %739 = vmatpush1.bf16.xpose.msra.mxu0 0
    %740 = vmatprep.subr.bf16.mxu0 0
    %741 = vmatpush1.bf16.xpose.msra.mxu0 0
    %742 = vmatprep.subr.bf16.mxu0 0
    %743 = vmatpush1.bf16.xpose.msra.mxu0 0
    %744 = vmatprep.subr.bf16.mxu0 %v341
    %745 = vmatpush1.bf16.xpose.msra.mxu0 %v340
    %746 = vmatprep.subr.bf16.mxu0 0
    %747 = vmatpush2.bf16.xpose.msra.mxu0 0
    %748 = vmatprep.subr.bf16.mxu0 0
    %749 = vmatpush2.bf16.xpose.msra.mxu0 0
    %750 = vmatprep.subr.bf16.mxu0 0
    %751 = vmatpush2.bf16.xpose.msra.mxu0 0
    %752 = vmatprep.subr.bf16.mxu0 0
    %753 = vmatpush2.bf16.xpose.msra.mxu0 0
    %754 = vmatprep.subr.bf16.mxu0 0
    %755 = vmatpush2.bf16.xpose.msra.mxu0 0
    %756 = vmatprep.subr.bf16.mxu0 0
    %757 = vmatpush2.bf16.xpose.msra.mxu0 0
    %758 = vmatprep.subr.bf16.mxu0 0
    %759 = vmatpush2.bf16.xpose.msra.mxu0 0
    %760 = vmatprep.subr.bf16.mxu0 0
    %761 = vmatpush2.bf16.xpose.msra.mxu0 0
    %762 = vmatprep.mubr.bf16.mxu0 %v224
    %763 = vmatmul.mubr.bf16.gmra.mxu0 %v222
    %v764 = vpop.f32.mrf.mxu0
    %v765 = vadd.f32 %v725, %v764
    %v766 = vpop.f32.mrf.mxu0
    %v767 = vpop.f32.mrf.mxu0
    %v768 = vpop.f32.mrf.mxu0
    %769 = vdwg.mxu0
    %770 = vmatprep.subr.bf16.mxu0 0
    %771 = vmatpush1.bf16.xpose.msra.mxu0 0
    %772 = vmatprep.subr.bf16.mxu0 0
    %773 = vmatpush1.bf16.xpose.msra.mxu0 0
    %774 = vmatprep.subr.bf16.mxu0 0
    %775 = vmatpush1.bf16.xpose.msra.mxu0 0
    %776 = vmatprep.subr.bf16.mxu0 0
    %777 = vmatpush1.bf16.xpose.msra.mxu0 0
    %778 = vmatprep.subr.bf16.mxu0 0
    %779 = vmatpush1.bf16.xpose.msra.mxu0 0
    %780 = vmatprep.subr.bf16.mxu0 0
    %781 = vmatpush1.bf16.xpose.msra.mxu0 0
    %782 = vmatprep.subr.bf16.mxu0 0
    %783 = vmatpush1.bf16.xpose.msra.mxu0 0
    %784 = vmatprep.subr.bf16.mxu0 %v343
    %785 = vmatpush1.bf16.xpose.msra.mxu0 %v342
    %786 = vmatprep.subr.bf16.mxu0 0
    %787 = vmatpush2.bf16.xpose.msra.mxu0 0
    %788 = vmatprep.subr.bf16.mxu0 0
    %789 = vmatpush2.bf16.xpose.msra.mxu0 0
    %790 = vmatprep.subr.bf16.mxu0 0
    %791 = vmatpush2.bf16.xpose.msra.mxu0 0
    %792 = vmatprep.subr.bf16.mxu0 0
    %793 = vmatpush2.bf16.xpose.msra.mxu0 0
    %794 = vmatprep.subr.bf16.mxu0 0
    %795 = vmatpush2.bf16.xpose.msra.mxu0 0
    %796 = vmatprep.subr.bf16.mxu0 0
    %797 = vmatpush2.bf16.xpose.msra.mxu0 0
    %798 = vmatprep.subr.bf16.mxu0 0
    %799 = vmatpush2.bf16.xpose.msra.mxu0 0
    %800 = vmatprep.subr.bf16.mxu0 0
    %801 = vmatpush2.bf16.xpose.msra.mxu0 0
    %802 = vmatprep.mubr.bf16.mxu0 %v221
    %803 = vmatmul.mubr.bf16.gmra.mxu0 %v207
    %v804 = vpop.f32.mrf.mxu0
    %v805 = vadd.f32 %v765, %v804
    %v806 = vpop.f32.mrf.mxu0
    %v807 = vpop.f32.mrf.mxu0
    %v808 = vpop.f32.mrf.mxu0
    %809 = vdwg.mxu0
    %810 = vmatprep.subr.bf16.mxu0 0
    %811 = vmatpush1.bf16.xpose.msra.mxu0 0
    %812 = vmatprep.subr.bf16.mxu0 0
    %813 = vmatpush1.bf16.xpose.msra.mxu0 0
    %814 = vmatprep.subr.bf16.mxu0 0
    %815 = vmatpush1.bf16.xpose.msra.mxu0 0
    %816 = vmatprep.subr.bf16.mxu0 0
    %817 = vmatpush1.bf16.xpose.msra.mxu0 0
    %818 = vmatprep.subr.bf16.mxu0 0
    %819 = vmatpush1.bf16.xpose.msra.mxu0 0
    %820 = vmatprep.subr.bf16.mxu0 0
    %821 = vmatpush1.bf16.xpose.msra.mxu0 0
    %822 = vmatprep.subr.bf16.mxu0 0
    %823 = vmatpush1.bf16.xpose.msra.mxu0 0
    %824 = vmatprep.subr.bf16.mxu0 %v345
    %825 = vmatpush1.bf16.xpose.msra.mxu0 %v344
    %826 = vmatprep.subr.bf16.mxu0 0
    %827 = vmatpush2.bf16.xpose.msra.mxu0 0
    %828 = vmatprep.subr.bf16.mxu0 0
    %829 = vmatpush2.bf16.xpose.msra.mxu0 0
    %830 = vmatprep.subr.bf16.mxu0 0
    %831 = vmatpush2.bf16.xpose.msra.mxu0 0
    %832 = vmatprep.subr.bf16.mxu0 0
    %833 = vmatpush2.bf16.xpose.msra.mxu0 0
    %834 = vmatprep.subr.bf16.mxu0 0
    %835 = vmatpush2.bf16.xpose.msra.mxu0 0
    %836 = vmatprep.subr.bf16.mxu0 0
    %837 = vmatpush2.bf16.xpose.msra.mxu0 0
    %838 = vmatprep.subr.bf16.mxu0 0
    %839 = vmatpush2.bf16.xpose.msra.mxu0 0
    %840 = vmatprep.subr.bf16.mxu0 0
    %841 = vmatpush2.bf16.xpose.msra.mxu0 0
    %842 = vmatprep.mubr.bf16.mxu0 %v225
    %843 = vmatmul.mubr.bf16.gmra.mxu0 %v223
    %v844 = vpop.f32.mrf.mxu0
    %v845 = vadd.f32 %v805, %v844
    %v846 = vpop.f32.mrf.mxu0
    %v847 = vpop.f32.mrf.mxu0
    %v848 = vpop.f32.mrf.mxu0
    %849 = vdwg.mxu0
    %vm850 = vcmask 74752
    %851 = vst.msk [vmem:[#allocation7] sm:$0x3] %vm850, %v845
    // Predicated region
    $region22: #{tpu_custom_call.1} parent=1 // pred_check
      _
    $region23: #{tpu_custom_call.1} parent=1 // pred_check_branch
      %853 = sbr.rel (0) target = $region25
    $region24: #{tpu_custom_call.1} parent=1 // pred_region
      %s855 = ssub.s32 32, 32
      %856 = vsyncadd [#allocation4], %s855
      %s858 = sshll.u32 [#allocation7], 4
      %s859 = int_to_ptr.vmem [resolvable:$true] %s858
      %861 = dma.vmem_to_hbm [thread:$0]  %s859, 32, %s3, [#allocation4]
    $region25: #{tpu_custom_call.1} parent=1 // pred_fallthru
      _
    // Predicated region
    $region26: #{tpu_custom_call.1} parent=1 // pred_check
      _
    $region27: #{tpu_custom_call.1} parent=1 // pred_check_branch
      %863 = sbr.rel (0) target = $region29
    $region28: #{tpu_custom_call.1} parent=1 // pred_region
      %864 = dma.done [#allocation4], 32
    $region29: #{tpu_custom_call.1} parent=1 // pred_fallthru
      _
    %865 = vsyncpa [#allocation3], 1
    %866 = vsyncpa [#allocation6], 1
    %867 = vsyncpa [#allocation4], 1

</llo_original>
